<compile_context>
chip_gen: v5e
topology: v5e:2x2
jax: 0.10.0
libtpu: 0.0.40
codegen_flags: <defaults>
</compile_context>

<pallas_src>
import math

import jax
import jax.numpy as jnp
import numpy as np
from jax.experimental import pallas as pl
from jax.experimental.pallas import tpu as pltpu

_LANE = 128
_MAX_BLOCK_ELEMS = 512 * 1024  # ~2 MiB per f32 block: safe on v5e/v6e/v7x


def _identity_copy_kernel(x_ref, o_ref):
    # Full-tile copy.  The output is aliased onto the input buffer, so this is
    # effectively re-writing the values already resident at that HBM address.
    o_ref[...] = x_ref[...]


def _pick_layout(padded_total: int):
    """Choose a lane-dense 2D layout (rows, cols) and a row-tile size."""
    cols = _LANE
    for cand in (1024, 512, 256, 128):
        if padded_total % cand == 0:
            cols = cand
            break
    rows = padded_total // cols
    tile_rows = max(8, (_MAX_BLOCK_ELEMS // cols) // 8 * 8)  # multiple of 8
    if rows <= tile_rows:
        tile_rows = rows  # full row extent is always a legal block dim
    return rows, cols, tile_rows


def _network_forward_impl(dna_x: jax.Array) -> jax.Array:
    """Pallas implementation of Network.forward(DNA_x) -> DNA_x (identity)."""
    orig_shape = dna_x.shape
    dtype = dna_x.dtype
    total = math.prod(orig_shape)

    # Flatten and pad to a multiple of 128 so the kernel sees a lane-dense
    # (rows, k*128) slab -> unmasked full-width vector stores on writeback.
    flat = dna_x.reshape((total,))
    pad = (-total) % _LANE
    if pad:
        flat = jnp.pad(flat, (0, pad))
    padded_total = total + pad

    rows, cols, tile_rows = _pick_layout(padded_total)
    x2d = flat.reshape((rows, cols))

    grid = (pl.cdiv(rows, tile_rows),)

    out = pl.pallas_call(
        _identity_copy_kernel,
        out_shape=jax.ShapeDtypeStruct((rows, cols), dtype),
        grid_spec=pltpu.PrefetchScalarGridSpec(
            num_scalar_prefetch=0,
            grid=grid,
            in_specs=[pl.BlockSpec((tile_rows, cols), lambda i: (i, 0))],
            out_specs=pl.BlockSpec((tile_rows, cols), lambda i: (i, 0)),
        ),
        # Output aliases the input buffer: the identity needs no new HBM
        # allocation, and XLA can drop the round trip when it owns the operand.
        input_output_aliases={0: 0},
        compiler_params=pltpu.CompilerParams(
            # Single row-tile axis; "parallel" lets v7x shard tiles over both
            # TensorCores and is harmless on single-TC v5e/v6e.
            dimension_semantics=("parallel",),
            vmem_limit_bytes=32 * 1024 * 1024,
        ),
    )(x2d)

    out_flat = out.reshape((padded_total,))
    if pad:
        out_flat = out_flat[:total]
    return out_flat.reshape(orig_shape)


# jit so the reshape/pad/slice plumbing and the aliased pallas_call live in one
# XLA computation (lets XLA actually exploit the output/operand aliasing).
network_forward = jax.jit(_network_forward_impl)


if __name__ == "__main__":
    key = jax.random.PRNGKey(0)

    # DANQ-style DNA input: (batch, 4 nucleotide channels, sequence length).
    batch, channels, seq = 2, 4, 16
    dna_x = jax.random.normal(key, (batch, channels, seq), dtype=jnp.float32)
    dna_x_np = np.asarray(dna_x)  # snapshot for the reference check

    y = jax.block_until_ready(network_forward(dna_x))
    assert y.shape == dna_x_np.shape
    assert y.dtype == jnp.float32
    assert np.array_equal(np.asarray(y), dna_x_np), "identity forward mismatch"

    # Second shape exercises the padding / lane-dense repack path (L=1000 like DANQ).
    dna_x2 = jax.random.normal(jax.random.PRNGKey(0), (2, 4, 1000), dtype=jnp.float32)
    dna_x2_np = np.asarray(dna_x2)
    y2 = jax.block_until_ready(network_forward(dna_x2))
    assert y2.shape == dna_x2_np.shape
    assert np.array_equal(np.asarray(y2), dna_x2_np), "identity forward mismatch (padded path)"

    print("KERNEL_OK")
</pallas_src>

<mosaic_0001>
module attributes {stable_mosaic.version = 11 : i64} {
  func.func @_identity_copy_kernel(%arg0: i32, %arg1: memref<1x128xf32, #tpu.memory_space<vmem>>, %arg2: memref<1x128xf32, #tpu.memory_space<vmem>>) attributes {dimension_semantics = [#tpu.dimension_semantics<parallel>], iteration_bounds = array<i64: 1>, scalar_prefetch = 0 : i64, scratch_operands = 0 : i64, tpu.core_type = #tpu.core_type<tc>, window_params = [{transform_indices = @transform_0, window_bounds = array<i64: 1, 128>}, {transform_indices = @transform_1, window_bounds = array<i64: 1, 128>}]} {
    %c0 = arith.constant 0 : index
    %c0_0 = arith.constant 0 : index
    %0 = vector.load %arg1[%c0, %c0_0] : memref<1x128xf32, #tpu.memory_space<vmem>>, vector<1x128xf32>
    %c0_1 = arith.constant 0 : index
    %c0_2 = arith.constant 0 : index
    %1 = vector.load %arg2[%c0_1, %c0_2] : memref<1x128xf32, #tpu.memory_space<vmem>>, vector<1x128xf32>
    tpu.vector_store %arg2[%c0_1, %c0_2], %0 {strides = array<i32>} : memref<1x128xf32, #tpu.memory_space<vmem>>, vector<1x128xf32>,
    return
  }
  func.func @transform_0(%arg0: i32) -> (i32, i32) {
    %c0_i32 = arith.constant 0 : i32
    %c0_i32_0 = arith.constant 0 : i32
    return %arg0, %c0_i32 : i32, i32
  }
  func.func @transform_1(%arg0: i32) -> (i32, i32) {
    %c0_i32 = arith.constant 0 : i32
    %c0_i32_0 = arith.constant 0 : i32
    return %arg0, %c0_i32 : i32, i32
  }
}

</mosaic_0001>

<llo_original>
// kernel: _network_forward_impl.1
$region0: #{_network_forward_impl.1}
  #allocation0 [shape = 'u32[]', space=smem, size = 0x4, offset = 0x4, fixed_abs, tag = 'smem constant byte address 0x4 - core index']
  #allocation1 [shape = 'u32[72,128]{1,0:T(1,128)}', space=vmem, size = 0x9000, scoped, tag = 'internal scratch']
  %s0 = inlined_call_operand.vmem [shape: f32[1,128], index: 0, kind: input, shape index: {}, may-alias: {0,1}]
  %s1 = inlined_call_operand.vmem [shape: f32[1,128], index: 1, kind: output, shape index: {}, may-alias: {0,1}]
  %s2 = sld [smem:[#allocation0]]
  $region14: #{_network_forward_impl.1} parent=0
    _
  %s4 = ssub.s32 1, %s2
  %s5 = scalar_select 0, %s4, %s2
  // Predicated region
  $region2: #{_network_forward_impl.1} parent=0 // pred_check
    _
  $region3: #{_network_forward_impl.1} parent=0 // pred_check_branch
    %7 = sbr.rel (0) target = $region5
  $region4: #{_network_forward_impl.1} parent=0 // pred_region
    _
  $region5: #{_network_forward_impl.1} parent=0 // pred_fallthru
    _
  %v8 = vld [vmem:[%s0] sm:$0x1]
  %9 = vst [vmem:[%s1] sm:$0x1] %v8
  // Predicated region
  $region6: #{_network_forward_impl.1} parent=0 // pred_check
    _
  $region7: #{_network_forward_impl.1} parent=0 // pred_check_branch
    %11 = sbr.rel (0) target = $region9
  $region8: #{_network_forward_impl.1} parent=0 // pred_region
    _
  $region9: #{_network_forward_impl.1} parent=0 // pred_fallthru
    _
  // Predicated region
  $region10: #{_network_forward_impl.1} parent=0 // pred_check
    _
  $region11: #{_network_forward_impl.1} parent=0 // pred_check_branch
    %13 = sbr.rel (0) target = $region13
  $region12: #{_network_forward_impl.1} parent=0 // pred_region
    _
  $region13: #{_network_forward_impl.1} parent=0 // pred_fallthru
    _

</llo_original>
